<compile_context>
chip_gen: v7x
topology: tpu7x:2x2x1
jax: 0.10.0
libtpu: 0.0.40
codegen_flags: <defaults>
</compile_context>

<pallas_src>
import functools

import jax
import jax.numpy as jnp
from jax import lax
from jax.experimental import pallas as pl
from jax.experimental.pallas import tpu as pltpu


# ----------------------------------------------------------------------------
# helpers
# ----------------------------------------------------------------------------
def _round_up(n, m):
    return ((n + m - 1) // m) * m


def _bn_scale_shift(bn, eps=1e-5):
    gamma, beta, mean, var = bn
    scale = gamma / jnp.sqrt(var + eps)
    shift = beta - mean * scale
    return scale, shift


# ----------------------------------------------------------------------------
# Pallas kernels
# ----------------------------------------------------------------------------
def fused_matmul_kernel(*refs, apply_relu, has_residual):
    """out = maybe_relu((A @ B) + shift [+ residual]); bf16 operands, f32 acc."""
    if has_residual:
        a_ref, b_ref, shift_ref, sc_ref, o_ref = refs
    else:
        a_ref, b_ref, shift_ref, o_ref = refs
    acc = jnp.dot(a_ref[...], b_ref[...], preferred_element_type=jnp.float32)
    out = acc + shift_ref[...]
    if has_residual:
        out = out + sc_ref[...]
    if apply_relu:
        out = jnp.maximum(out, 0.0)
    o_ref[...] = out.astype(o_ref.dtype)


def relu_kernel(x_ref, o_ref):
    o_ref[...] = jnp.maximum(x_ref[...], 0.0)


# ----------------------------------------------------------------------------
# Pallas wrappers
# ----------------------------------------------------------------------------
def fused_conv_matmul(a, b, shift, residual=None, apply_relu=False,
                      out_dtype=jnp.float32, tm_max=512):
    """a: (M, K) bf16 patch matrix; b: (K, P) bf16 BN-folded weights (P % 128 == 0);
    shift: (1, P) f32; residual: optional (M, P) f32.  Returns (M, P) out_dtype."""
    M, K = a.shape
    Kb, P = b.shape
    assert Kb == K and P % 128 == 0 and shift.shape == (1, P)
    if residual is not None:
        assert residual.shape == (M, P), (residual.shape, (M, P))

    a = a.astype(jnp.bfloat16)
    b = b.astype(jnp.bfloat16)

    # Pad rows only up to a multiple of 8 (usually a no-op) instead of a full
    # jnp.pad-to-TM + trailing slice over the whole matrix.
    Mp = _round_up(M, 8)
    if Mp != M:
        a = jnp.pad(a, ((0, Mp - M), (0, 0)))
        if residual is not None:
            residual = jnp.pad(residual, ((0, Mp - M), (0, 0)))

    TM = min(tm_max, Mp)          # tunable; multiple of 8 by construction
    grid = (pl.cdiv(Mp, TM),)

    in_specs = [
        pl.BlockSpec((TM, K), lambda i: (i, 0)),   # A tile (K kept whole)
        pl.BlockSpec((K, P), lambda i: (0, 0)),    # whole BN-folded weights
        pl.BlockSpec((1, P), lambda i: (0, 0)),    # BN shift
    ]
    args = [a, b, shift]
    has_residual = residual is not None
    if has_residual:
        in_specs.append(pl.BlockSpec((TM, P), lambda i: (i, 0)))  # fused residual
        args.append(residual)

    # TODO(synk): for deep-layer shapes (large K * P) add a K grid axis with a
    # VMEM f32 accumulator so the weight block fits v7x's 64 MiB VMEM.
    bytes_accessed = (Mp * K * 2 + K * P * 2 + P * 4 + Mp * P * 4
                      + (Mp * P * 4 if has_residual else 0))
    out = pl.pallas_call(
        functools.partial(fused_matmul_kernel,
                          apply_relu=apply_relu, has_residual=has_residual),
        out_shape=jax.ShapeDtypeStruct((Mp, P), out_dtype),
        grid=grid,
        in_specs=in_specs,
        out_specs=pl.BlockSpec((TM, P), lambda i: (i, 0)),
        compiler_params=pltpu.CompilerParams(dimension_semantics=("parallel",)),
        cost_estimate=pl.CostEstimate(flops=2 * Mp * K * P, transcendentals=0,
                                      bytes_accessed=bytes_accessed),
    )(*args)
    return out[:M] if Mp != M else out


def relu_pallas(x):
    """Lane-dense, tiled elementwise ReLU."""
    shp = x.shape
    total = x.size
    LANE = 128
    rows = pl.cdiv(total, LANE)
    rows_p = _round_up(rows, 8)
    flat = x.reshape(-1)
    pad = rows_p * LANE - total
    if pad:
        flat = jnp.pad(flat, (0, pad))
    x2 = flat.reshape(rows_p, LANE)
    TB = min(512, rows_p)
    out = pl.pallas_call(
        relu_kernel,
        out_shape=jax.ShapeDtypeStruct((rows_p, LANE), x.dtype),
        grid=(pl.cdiv(rows_p, TB),),
        in_specs=[pl.BlockSpec((TB, LANE), lambda i: (i, 0))],
        out_specs=pl.BlockSpec((TB, LANE), lambda i: (i, 0)),
        compiler_params=pltpu.CompilerParams(dimension_semantics=("parallel",)),
    )(x2)
    out = out.reshape(-1)
    if pad:
        out = out[:total]
    return out.reshape(shp)


# ----------------------------------------------------------------------------
# Glue (plain JAX): patch extraction, weight/BN folding
# ----------------------------------------------------------------------------
def im2col(x_nhwc, ksize, stride, pad):
    """(N,H,W,C) -> (N*Ho*Wo, ksize*ksize*C), channel order (kh, kw, c)."""
    N, H, W, C = x_nhwc.shape
    xp = jnp.pad(x_nhwc, ((0, 0), (pad, pad), (pad, pad), (0, 0)))
    Ho = (H + 2 * pad - ksize) // stride + 1
    Wo = (W + 2 * pad - ksize) // stride + 1
    patches = []
    for kh in range(ksize):
        for kw in range(ksize):
            patches.append(
                xp[:, kh:kh + stride * Ho:stride, kw:kw + stride * Wo:stride, :])
    col = jnp.concatenate(patches, axis=-1)            # (N, Ho, Wo, k*k*C)
    return col.reshape(N * Ho * Wo, ksize * ksize * C), (N, Ho, Wo)


def fold_conv_bn(w_oihw, bn, p_out):
    """Fold BN scale into the conv weight and emit a lane-padded bf16 matrix.

    Returns (K, P) bf16 weights (zero-padded output channels) and (1, P) f32 shift.
    Row order (kh, kw, cin) matches im2col's column order."""
    scale, shift = _bn_scale_shift(bn)
    cout = w_oihw.shape[0]
    w_mat = jnp.transpose(w_oihw, (2, 3, 1, 0)).reshape(-1, cout)
    w_mat = w_mat * scale[None, :]
    w_p = jnp.pad(w_mat, ((0, 0), (0, p_out - cout))).astype(jnp.bfloat16)
    shift_p = jnp.pad(shift, (0, p_out - cout)).reshape(1, p_out).astype(jnp.float32)
    return w_p, shift_p


# ----------------------------------------------------------------------------
# BasicBlock forward
# ----------------------------------------------------------------------------
def basic_block_forward(x_nchw, params, stride):
    in_planes = x_nchw.shape[1]
    planes = params["conv1_w"].shape[0]
    P = _round_up(planes, 128)           # lane-dense output width

    x_nhwc = jnp.transpose(x_nchw, (0, 2, 3, 1))
    x_bf16 = x_nhwc.astype(jnp.bfloat16)
    N, H, W, _ = x_nhwc.shape

    # conv1 -> bn1 -> relu, fused in one kernel; output kept bf16 (feeds conv2 only)
    col1, (_, Ho, Wo) = im2col(x_bf16, 3, stride, 1)
    w1, sh1 = fold_conv_bn(params["conv1_w"], params["bn1"], P)
    out1 = fused_conv_matmul(col1, w1, sh1, apply_relu=True, out_dtype=jnp.bfloat16)
    out1_nhwc = out1[:, :planes].reshape(N, Ho, Wo, planes)

    # shortcut path: f32, P-padded, consumed directly by conv2's fused epilogue
    if stride != 1 or in_planes != planes:
        xs = x_bf16[:, ::stride, ::stride, :].reshape(N * Ho * Wo, in_planes)
        wsc, shsc = fold_conv_bn(params["sc_w"], params["sc_bn"], P)
        sc = fused_conv_matmul(xs, wsc, shsc, apply_relu=False)         # (M, P) f32
    else:
        sc = jnp.pad(x_nhwc.reshape(N * H * W, in_planes),
                     ((0, 0), (0, P - in_planes)))

    # conv2 -> bn2 -> (+ shortcut), all fused in one kernel epilogue
    col2, _ = im2col(out1_nhwc, 3, 1, 1)
    w2, sh2 = fold_conv_bn(params["conv2_w"], params["bn2"], P)
    res = fused_conv_matmul(col2, w2, sh2, residual=sc, apply_relu=False)
    res_nchw = jnp.transpose(res[:, :planes].reshape(N, Ho, Wo, planes), (0, 3, 1, 2))

    # out = F.relu(x): exact PyTorch semantics — the module's return value is relu(x).
    y = relu_pallas(x_nchw)
    return y, res_nchw


# ----------------------------------------------------------------------------
# References
# ----------------------------------------------------------------------------
def ref_forward_matched(x, params, stride):
    """Mirrors the kernel's numerics (bf16 operands, f32 accumulate, BN folded)."""
    def conv_bn(inp, w, bn, s, p, relu):
        scale, shift = _bn_scale_shift(bn)
        w_f = (w * scale[:, None, None, None]).astype(jnp.bfloat16)
        out = lax.conv_general_dilated(
            inp.astype(jnp.bfloat16), w_f, (s, s), [(p, p), (p, p)],
            dimension_numbers=("NCHW", "OIHW", "NCHW"),
            preferred_element_type=jnp.float32)
        out = out + shift[None, :, None, None]
        return jnp.maximum(out, 0.0) if relu else out

    in_planes, planes = x.shape[1], params["conv1_w"].shape[0]
    out = conv_bn(x, params["conv1_w"], params["bn1"], stride, 1, True)
    out = conv_bn(out, params["conv2_w"], params["bn2"], 1, 1, False)
    if stride != 1 or in_planes != planes:
        sc = conv_bn(x, params["sc_w"], params["sc_bn"], stride, 0, False)
    else:
        sc = x
    out = out + sc
    return jax.nn.relu(x), out


def ref_forward_f32(x, params, stride):
    """Full-f32, highest-precision reference (loose sanity check)."""
    def conv(inp, w, s, p):
        return lax.conv_general_dilated(
            inp, w, (s, s), [(p, p), (p, p)],
            dimension_numbers=("NCHW", "OIHW", "NCHW"),
            precision=lax.Precision.HIGHEST)

    def bn(inp, b):
        scale, shift = _bn_scale_shift(b)
        return inp * scale[None, :, None, None] + shift[None, :, None, None]

    in_planes, planes = x.shape[1], params["conv1_w"].shape[0]
    out = jax.nn.relu(bn(conv(x, params["conv1_w"], stride, 1), params["bn1"]))
    out = bn(conv(out, params["conv2_w"], 1, 1), params["bn2"])
    if stride != 1 or in_planes != planes:
        sc = bn(conv(x, params["sc_w"], stride, 0), params["sc_bn"])
    else:
        sc = x
    out = out + sc
    return jax.nn.relu(x), out


# ----------------------------------------------------------------------------
if __name__ == "__main__":
    in_planes, planes, stride = 4, 8, 2
    N, H, W = 2, 16, 16

    key = jax.random.PRNGKey(0)
    ks = jax.random.split(key, 8)

    def make_bn(k, c):
        k1, k2, k3, k4 = jax.random.split(k, 4)
        gamma = 1.0 + 0.1 * jax.random.normal(k1, (c,), jnp.float32)
        beta = 0.1 * jax.random.normal(k2, (c,), jnp.float32)
        mean = 0.1 * jax.random.normal(k3, (c,), jnp.float32)
        var = jax.random.uniform(k4, (c,), jnp.float32, 0.5, 1.5)
        return (gamma, beta, mean, var)

    params = {
        "conv1_w": 0.2 * jax.random.normal(ks[0], (planes, in_planes, 3, 3), jnp.float32),
        "conv2_w": 0.2 * jax.random.normal(ks[1], (planes, planes, 3, 3), jnp.float32),
        "sc_w":    0.2 * jax.random.normal(ks[2], (planes, in_planes, 1, 1), jnp.float32),
        "bn1": make_bn(ks[3], planes),
        "bn2": make_bn(ks[4], planes),
        "sc_bn": make_bn(ks[5], planes),
    }
    x = jax.random.normal(ks[6], (N, in_planes, H, W), jnp.float32)

    fwd = jax.jit(lambda xx, pp: basic_block_forward(xx, pp, stride))
    y, residual = fwd(x, params)
    y = jax.block_until_ready(y)
    residual = jax.block_until_ready(residual)

    # The module's return value is relu(x): check it exactly.
    y_ref, res_ref = ref_forward_matched(x, params, stride)
    assert jnp.allclose(y, y_ref, atol=1e-6), "returned output (relu(x)) mismatch"
    # Residual path vs a reference with matched numerics (bf16 operands, f32 acc).
    assert jnp.allclose(residual, res_ref, atol=2e-3, rtol=2e-3), \
        "residual path mismatch (matched precision)"
    # Loose sanity check vs a full-f32 high-precision reference.
    _, res_f32 = ref_forward_f32(x, params, stride)
    assert jnp.allclose(residual, res_f32, atol=1e-1, rtol=1e-1), \
        "residual path mismatch (f32 reference)"

    print("KERNEL_OK")
</pallas_src>

<mosaic_0001>
module attributes {stable_mosaic.version = 11 : i64} {
  func.func @fused_matmul_kernel(%arg0: i32, %arg1: memref<128x36xbf16, #tpu.memory_space<vmem>>, %arg2: memref<36x128xbf16, #tpu.memory_space<vmem>>, %arg3: memref<1x128xf32, #tpu.memory_space<vmem>>, %arg4: memref<128x128xbf16, #tpu.memory_space<vmem>>) attributes {dimension_semantics = [#tpu.dimension_semantics<parallel>], iteration_bounds = array<i64: 1>, scalar_prefetch = 0 : i64, scratch_operands = 0 : i64, tpu.core_type = #tpu.core_type<tc>, window_params = [{transform_indices = @transform_0, window_bounds = array<i64: 128, 36>}, {pipeline_mode = #tpu.pipeline_mode<synchronous>, transform_indices = @transform_1, window_bounds = array<i64: 36, 128>}, {pipeline_mode = #tpu.pipeline_mode<synchronous>, transform_indices = @transform_2, window_bounds = array<i64: 1, 128>}, {transform_indices = @transform_3, window_bounds = array<i64: 128, 128>}]} {
    %c0 = arith.constant 0 : index
    %c0_0 = arith.constant 0 : index
    %0 = vector.load %arg1[%c0, %c0_0] : memref<128x36xbf16, #tpu.memory_space<vmem>>, vector<128x36xbf16>
    %c0_1 = arith.constant 0 : index
    %c0_2 = arith.constant 0 : index
    %1 = vector.load %arg2[%c0_1, %c0_2] : memref<36x128xbf16, #tpu.memory_space<vmem>>, vector<36x128xbf16>
    %cst = arith.constant dense<0.000000e+00> : vector<128x128xf32>
    %2 = tpu.matmul %0, %1, %cst {dimension_numbers = #tpu.dot_dimension_numbers<[1], [0], [0], [1], [0, 0, 1, 1], [], []>} : vector<128x36xbf16>, vector<36x128xbf16>, vector<128x128xf32> -> vector<128x128xf32>
    %c0_3 = arith.constant 0 : index
    %c0_4 = arith.constant 0 : index
    %3 = vector.load %arg3[%c0_3, %c0_4] : memref<1x128xf32, #tpu.memory_space<vmem>>, vector<1x128xf32>
    %4 = vector.broadcast %3 : vector<1x128xf32> to vector<128x128xf32>
    %5 = arith.addf %2, %4 : vector<128x128xf32>
    %cst_5 = arith.constant 0.000000e+00 : f32
    %6 = vector.broadcast %cst_5 : f32 to vector<128x128xf32>
    %7 = arith.maximumf %5, %6 : vector<128x128xf32>
    %8 = arith.truncf %7 : vector<128x128xf32> to vector<128x128xbf16>
    %c0_6 = arith.constant 0 : index
    %c0_7 = arith.constant 0 : index
    %9 = vector.load %arg4[%c0_6, %c0_7] : memref<128x128xbf16, #tpu.memory_space<vmem>>, vector<128x128xbf16>
    tpu.vector_store %arg4[%c0_6, %c0_7], %8 {strides = array<i32>} : memref<128x128xbf16, #tpu.memory_space<vmem>>, vector<128x128xbf16>,
    return
  }
  func.func @transform_0(%arg0: i32) -> (i32, i32) {
    %c0_i32 = arith.constant 0 : i32
    %c0_i32_0 = arith.constant 0 : i32
    return %arg0, %c0_i32 : i32, i32
  }
  func.func @transform_1(%arg0: i32) -> (i32, i32) {
    %c0_i32 = arith.constant 0 : i32
    %c0_i32_0 = arith.constant 0 : i32
    %c0_i32_1 = arith.constant 0 : i32
    return %c0_i32, %c0_i32_0 : i32, i32
  }
  func.func @transform_2(%arg0: i32) -> (i32, i32) {
    %c0_i32 = arith.constant 0 : i32
    %c0_i32_0 = arith.constant 0 : i32
    %c0_i32_1 = arith.constant 0 : i32
    return %c0_i32, %c0_i32_0 : i32, i32
  }
  func.func @transform_3(%arg0: i32) -> (i32, i32) {
    %c0_i32 = arith.constant 0 : i32
    %c0_i32_0 = arith.constant 0 : i32
    return %arg0, %c0_i32 : i32, i32
  }
}

module attributes {stable_mosaic.version = 11 : i64} {
  func.func @fused_matmul_kernel(%arg0: i32, %arg1: memref<128x4xbf16, #tpu.memory_space<vmem>>, %arg2: memref<4x128xbf16, #tpu.memory_space<vmem>>, %arg3: memref<1x128xf32, #tpu.memory_space<vmem>>, %arg4: memref<128x128xf32, #tpu.memory_space<vmem>>) attributes {dimension_semantics = [#tpu.dimension_semantics<parallel>], iteration_bounds = array<i64: 1>, scalar_prefetch = 0 : i64, scratch_operands = 0 : i64, tpu.core_type = #tpu.core_type<tc>, window_params = [{transform_indices = @transform_0, window_bounds = array<i64: 128, 4>}, {pipeline_mode = #tpu.pipeline_mode<synchronous>, transform_indices = @transform_1, window_bounds = array<i64: 4, 128>}, {pipeline_mode = #tpu.pipeline_mode<synchronous>, transform_indices = @transform_2, window_bounds = array<i64: 1, 128>}, {transform_indices = @transform_3, window_bounds = array<i64: 128, 128>}]} {
    %c0 = arith.constant 0 : index
    %c0_0 = arith.constant 0 : index
    %0 = vector.load %arg1[%c0, %c0_0] : memref<128x4xbf16, #tpu.memory_space<vmem>>, vector<128x4xbf16>
    %c0_1 = arith.constant 0 : index
    %c0_2 = arith.constant 0 : index
    %1 = vector.load %arg2[%c0_1, %c0_2] : memref<4x128xbf16, #tpu.memory_space<vmem>>, vector<4x128xbf16>
    %cst = arith.constant dense<0.000000e+00> : vector<128x128xf32>
    %2 = tpu.matmul %0, %1, %cst {dimension_numbers = #tpu.dot_dimension_numbers<[1], [0], [0], [1], [0, 0, 1, 1], [], []>} : vector<128x4xbf16>, vector<4x128xbf16>, vector<128x128xf32> -> vector<128x128xf32>
    %c0_3 = arith.constant 0 : index
    %c0_4 = arith.constant 0 : index
    %3 = vector.load %arg3[%c0_3, %c0_4] : memref<1x128xf32, #tpu.memory_space<vmem>>, vector<1x128xf32>
    %4 = vector.broadcast %3 : vector<1x128xf32> to vector<128x128xf32>
    %5 = arith.addf %2, %4 : vector<128x128xf32>
    %c0_5 = arith.constant 0 : index
    %c0_6 = arith.constant 0 : index
    %6 = vector.load %arg4[%c0_5, %c0_6] : memref<128x128xf32, #tpu.memory_space<vmem>>, vector<128x128xf32>
    tpu.vector_store %arg4[%c0_5, %c0_6], %5 {strides = array<i32>} : memref<128x128xf32, #tpu.memory_space<vmem>>, vector<128x128xf32>,
    return
  }
  func.func @transform_0(%arg0: i32) -> (i32, i32) {
    %c0_i32 = arith.constant 0 : i32
    %c0_i32_0 = arith.constant 0 : i32
    return %arg0, %c0_i32 : i32, i32
  }
  func.func @transform_1(%arg0: i32) -> (i32, i32) {
    %c0_i32 = arith.constant 0 : i32
    %c0_i32_0 = arith.constant 0 : i32
    %c0_i32_1 = arith.constant 0 : i32
    return %c0_i32, %c0_i32_0 : i32, i32
  }
  func.func @transform_2(%arg0: i32) -> (i32, i32) {
    %c0_i32 = arith.constant 0 : i32
    %c0_i32_0 = arith.constant 0 : i32
    %c0_i32_1 = arith.constant 0 : i32
    return %c0_i32, %c0_i32_0 : i32, i32
  }
  func.func @transform_3(%arg0: i32) -> (i32, i32) {
    %c0_i32 = arith.constant 0 : i32
    %c0_i32_0 = arith.constant 0 : i32
    return %arg0, %c0_i32 : i32, i32
  }
}

module attributes {stable_mosaic.version = 11 : i64} {
  func.func @fused_matmul_kernel(%arg0: i32, %arg1: memref<128x72xbf16, #tpu.memory_space<vmem>>, %arg2: memref<72x128xbf16, #tpu.memory_space<vmem>>, %arg3: memref<1x128xf32, #tpu.memory_space<vmem>>, %arg4: memref<128x128xf32, #tpu.memory_space<vmem>>, %arg5: memref<128x128xf32, #tpu.memory_space<vmem>>) attributes {dimension_semantics = [#tpu.dimension_semantics<parallel>], iteration_bounds = array<i64: 1>, scalar_prefetch = 0 : i64, scratch_operands = 0 : i64, tpu.core_type = #tpu.core_type<tc>, window_params = [{transform_indices = @transform_0, window_bounds = array<i64: 128, 72>}, {pipeline_mode = #tpu.pipeline_mode<synchronous>, transform_indices = @transform_1, window_bounds = array<i64: 72, 128>}, {pipeline_mode = #tpu.pipeline_mode<synchronous>, transform_indices = @transform_2, window_bounds = array<i64: 1, 128>}, {transform_indices = @transform_3, window_bounds = array<i64: 128, 128>}, {transform_indices = @transform_4, window_bounds = array<i64: 128, 128>}]} {
    %c0 = arith.constant 0 : index
    %c0_0 = arith.constant 0 : index
    %0 = vector.load %arg1[%c0, %c0_0] : memref<128x72xbf16, #tpu.memory_space<vmem>>, vector<128x72xbf16>
    %c0_1 = arith.constant 0 : index
    %c0_2 = arith.constant 0 : index
    %1 = vector.load %arg2[%c0_1, %c0_2] : memref<72x128xbf16, #tpu.memory_space<vmem>>, vector<72x128xbf16>
    %cst = arith.constant dense<0.000000e+00> : vector<128x128xf32>
    %2 = tpu.matmul %0, %1, %cst {dimension_numbers = #tpu.dot_dimension_numbers<[1], [0], [0], [1], [0, 0, 1, 1], [], []>} : vector<128x72xbf16>, vector<72x128xbf16>, vector<128x128xf32> -> vector<128x128xf32>
    %c0_3 = arith.constant 0 : index
    %c0_4 = arith.constant 0 : index
    %3 = vector.load %arg3[%c0_3, %c0_4] : memref<1x128xf32, #tpu.memory_space<vmem>>, vector<1x128xf32>
    %4 = vector.broadcast %3 : vector<1x128xf32> to vector<128x128xf32>
    %5 = arith.addf %2, %4 : vector<128x128xf32>
    %c0_5 = arith.constant 0 : index
    %c0_6 = arith.constant 0 : index
    %6 = vector.load %arg4[%c0_5, %c0_6] : memref<128x128xf32, #tpu.memory_space<vmem>>, vector<128x128xf32>
    %7 = arith.addf %5, %6 : vector<128x128xf32>
    %c0_7 = arith.constant 0 : index
    %c0_8 = arith.constant 0 : index
    %8 = vector.load %arg5[%c0_7, %c0_8] : memref<128x128xf32, #tpu.memory_space<vmem>>, vector<128x128xf32>
    tpu.vector_store %arg5[%c0_7, %c0_8], %7 {strides = array<i32>} : memref<128x128xf32, #tpu.memory_space<vmem>>, vector<128x128xf32>,
    return
  }
  func.func @transform_0(%arg0: i32) -> (i32, i32) {
    %c0_i32 = arith.constant 0 : i32
    %c0_i32_0 = arith.constant 0 : i32
    return %arg0, %c0_i32 : i32, i32
  }
  func.func @transform_1(%arg0: i32) -> (i32, i32) {
    %c0_i32 = arith.constant 0 : i32
    %c0_i32_0 = arith.constant 0 : i32
    %c0_i32_1 = arith.constant 0 : i32
    return %c0_i32, %c0_i32_0 : i32, i32
  }
  func.func @transform_2(%arg0: i32) -> (i32, i32) {
    %c0_i32 = arith.constant 0 : i32
    %c0_i32_0 = arith.constant 0 : i32
    %c0_i32_1 = arith.constant 0 : i32
    return %c0_i32, %c0_i32_0 : i32, i32
  }
  func.func @transform_3(%arg0: i32) -> (i32, i32) {
    %c0_i32 = arith.constant 0 : i32
    %c0_i32_0 = arith.constant 0 : i32
    return %arg0, %c0_i32 : i32, i32
  }
  func.func @transform_4(%arg0: i32) -> (i32, i32) {
    %c0_i32 = arith.constant 0 : i32
    %c0_i32_0 = arith.constant 0 : i32
    return %arg0, %c0_i32 : i32, i32
  }
}

module attributes {stable_mosaic.version = 11 : i64} {
  func.func @relu_kernel(%arg0: i32, %arg1: memref<16x128xf32, #tpu.memory_space<vmem>>, %arg2: memref<16x128xf32, #tpu.memory_space<vmem>>) attributes {dimension_semantics = [#tpu.dimension_semantics<parallel>], iteration_bounds = array<i64: 1>, scalar_prefetch = 0 : i64, scratch_operands = 0 : i64, tpu.core_type = #tpu.core_type<tc>, window_params = [{transform_indices = @transform_0, window_bounds = array<i64: 16, 128>}, {transform_indices = @transform_1, window_bounds = array<i64: 16, 128>}]} {
    %c0 = arith.constant 0 : index
    %c0_0 = arith.constant 0 : index
    %0 = vector.load %arg1[%c0, %c0_0] : memref<16x128xf32, #tpu.memory_space<vmem>>, vector<16x128xf32>
    %cst = arith.constant 0.000000e+00 : f32
    %1 = vector.broadcast %cst : f32 to vector<16x128xf32>
    %2 = arith.maximumf %0, %1 : vector<16x128xf32>
    %c0_1 = arith.constant 0 : index
    %c0_2 = arith.constant 0 : index
    %3 = vector.load %arg2[%c0_1, %c0_2] : memref<16x128xf32, #tpu.memory_space<vmem>>, vector<16x128xf32>
    tpu.vector_store %arg2[%c0_1, %c0_2], %2 {strides = array<i32>} : memref<16x128xf32, #tpu.memory_space<vmem>>, vector<16x128xf32>,
    return
  }
  func.func @transform_0(%arg0: i32) -> (i32, i32) {
    %c0_i32 = arith.constant 0 : i32
    %c0_i32_0 = arith.constant 0 : i32
    return %arg0, %c0_i32 : i32, i32
  }
  func.func @transform_1(%arg0: i32) -> (i32, i32) {
    %c0_i32 = arith.constant 0 : i32
    %c0_i32_0 = arith.constant 0 : i32
    return %arg0, %c0_i32 : i32, i32
  }
}

</mosaic_0001>

<llo_original>
// kernel: _lambda_.4
$region0: #{_lambda_.4}
  #allocation0 [shape = 'u32[]', space=smem, size = 0x4, offset = 0x4, fixed_abs, tag = 'smem constant byte address 0x4 - core index']
  #allocation1 [shape = 'u32[144,128]{1,0:T(1,128)}', space=vmem, size = 0x12000, scoped, tag = 'internal scratch']
  %s0 = inlined_call_operand.vmem [shape: bf16[128,36], index: 0, kind: input, shape index: {}]
  %s1 = inlined_call_operand.vmem [shape: bf16[36,128], index: 1, kind: input, shape index: {}]
  %s2 = inlined_call_operand.vmem [shape: f32[1,128], index: 2, kind: input, shape index: {}]
  %s3 = inlined_call_operand.vmem [shape: bf16[128,128], index: 3, kind: output, shape index: {}]
  %s4 = sld [smem:[#allocation0]]
  $region22: #{_lambda_.4} parent=0
    _
  %s6 = ssub.s32 1, %s4
  %s7 = scalar_select 0, %s6, %s4
  // Predicated region
  $region2: #{_lambda_.4} parent=0 // pred_check
    _
  $region3: #{_lambda_.4} parent=0 // pred_check_branch
    %9 = sbr.rel (0) target = $region5
  $region4: #{_lambda_.4} parent=0 // pred_region
    _
  $region5: #{_lambda_.4} parent=0 // pred_fallthru
    _
  // Predicated region
  $region6: #{_lambda_.4} parent=0 // pred_check
    _
  $region7: #{_lambda_.4} parent=0 // pred_check_branch
    %11 = sbr.rel (0) target = $region9
  $region8: #{_lambda_.4} parent=0 // pred_region
    _
  $region9: #{_lambda_.4} parent=0 // pred_fallthru
    _
  // Predicated region
  $region10: #{_lambda_.4} parent=0 // pred_check
    _
  $region11: #{_lambda_.4} parent=0 // pred_check_branch
    %13 = sbr.rel (0) target = $region13
  $region12: #{_lambda_.4} parent=0 // pred_region
    _
  $region13: #{_lambda_.4} parent=0 // pred_fallthru
    _
  %v15 = vld [vmem:[%s0] sm:$0xf]
  %v16 = vld [vmem:[%s0 + $0x4] sm:$0xf]
  %v17 = vld [vmem:[%s0 + $0x8] sm:$0xf]
  %v18 = vld [vmem:[%s0 + $0xc] sm:$0xf]
  %v19 = vld [vmem:[%s0 + $0x10] sm:$0xf]
  %v20 = vld [vmem:[%s0 + $0x14] sm:$0xf]
  %v21 = vld [vmem:[%s0 + $0x18] sm:$0xf]
  %v22 = vld [vmem:[%s0 + $0x1c] sm:$0xf]
  %v23 = vld [vmem:[%s0 + $0x20] sm:$0xf]
  %v24 = vld [vmem:[%s0 + $0x24] sm:$0xf]
  %v25 = vld [vmem:[%s0 + $0x28] sm:$0xf]
  %v26 = vld [vmem:[%s0 + $0x2c] sm:$0xf]
  %v27 = vld [vmem:[%s0 + $0x30] sm:$0xf]
  %v28 = vld [vmem:[%s0 + $0x34] sm:$0xf]
  %v29 = vld [vmem:[%s0 + $0x38] sm:$0xf]
  %v30 = vld [vmem:[%s0 + $0x3c] sm:$0xf]
  %v31 = vld [vmem:[%s1] sm:$0xf]
  %v32 = vld [vmem:[%s1 + $0x4] sm:$0xf]
  %v33 = vld [vmem:[%s1 + $0x8] sm:$0xf]
  %v34 = vld [vmem:[%s1 + $0xc] sm:$0xf]
  %v35 = vld [vmem:[%s1 + $0x10] sm:$0x3]
  %v36 = vld [vmem:[%s2] sm:$0x1]
  %v38 = vlaneseq
  %v39 = vshrl.u32 %v38, 7
  %v40 = vsub.s32 0, %v39
  %v41 = vrot.slane %v36, %v40
  %v59 = vunpack.c.l.b16 %v15
  %v60 = vunpack.c.l.b16 %v16
  %v61 = vunpack.c.l.b16 %v17
  %v62 = vunpack.c.l.b16 %v18
  %v63 = vunpack.c.l.b16 %v19
  %v64 = vunpack.c.l.b16 %v20
  %v65 = vunpack.c.l.b16 %v21
  %v66 = vunpack.c.l.b16 %v22
  %v67 = vunpack.c.l.b16 %v23
  %v68 = vunpack.c.l.b16 %v24
  %v69 = vunpack.c.l.b16 %v25
  %v70 = vunpack.c.l.b16 %v26
  %v71 = vunpack.c.l.b16 %v27
  %v72 = vunpack.c.l.b16 %v28
  %v73 = vunpack.c.l.b16 %v29
  %v74 = vunpack.c.l.b16 %v30
  %v75 = vpack.c.b16 %v60, %v59
  %v76 = vpack.c.b16 %v62, %v61
  %v77 = vpack.c.b16 %v64, %v63
  %v78 = vpack.c.b16 %v66, %v65
  %v79 = vpack.c.b16 %v68, %v67
  %v80 = vpack.c.b16 %v70, %v69
  %v81 = vpack.c.b16 %v72, %v71
  %v82 = vpack.c.b16 %v74, %v73
  %v88 = vunpack.c.l.b16 %v31
  %v89 = vunpack.c.l.b16 %v32
  %v90 = vunpack.c.l.b16 %v33
  %v91 = vunpack.c.l.b16 %v34
  %v92 = vunpack.c.l.b16 %v35
  %v93 = vpack.c.b16 %v89, %v88
  %v94 = vpack.c.b16 %v91, %v90
  %v95 = vpack.c.b16 %v92, %v92
  %vm98 = vcmask 293888
  %v100 = vsel %vm98, %v75, 0
  %v103 = vsel %vm98, %v76, 0
  %v106 = vsel %vm98, %v77, 0
  %v109 = vsel %vm98, %v78, 0
  %v112 = vsel %vm98, %v79, 0
  %v115 = vsel %vm98, %v80, 0
  %v118 = vsel %vm98, %v81, 0
  %v121 = vsel %vm98, %v82, 0
  %vm123 = vcmask 1041408
  %v125 = vsel %vm123, %v95, 0
  %127 = vmatprep.subr.bf16.mxu0 0
  %128 = vmatpush1.bf16.msra.mxu0 %v93
  %129 = vmatprep.subr.bf16.mxu0 0
  %130 = vmatpush1.bf16.msra.mxu0 %v94
  %131 = vmatprep.subr.bf16.mxu0 0
  %132 = vmatpush1.bf16.msra.mxu0 %v125
  %133 = vmatprep.subr.bf16.mxu0 0
  %134 = vmatpush1.bf16.msra.mxu0 0
  %135 = vmatprep.subr.bf16.mxu0 0
  %136 = vmatpush1.bf16.msra.mxu0 0
  %137 = vmatprep.subr.bf16.mxu0 0
  %138 = vmatpush1.bf16.msra.mxu0 0
  %139 = vmatprep.subr.bf16.mxu0 0
  %140 = vmatpush1.bf16.msra.mxu0 0
  %141 = vmatprep.subr.bf16.mxu0 0
  %142 = vmatpush1.bf16.msra.mxu0 0
  %143 = vmatprep.subr.bf16.mxu0 0
  %144 = vmatpush1.bf16.msra.mxu0 0
  %145 = vmatprep.subr.bf16.mxu0 0
  %146 = vmatpush1.bf16.msra.mxu0 0
  %147 = vmatprep.subr.bf16.mxu0 0
  %148 = vmatpush1.bf16.msra.mxu0 0
  %149 = vmatprep.subr.bf16.mxu0 0
  %150 = vmatpush1.bf16.msra.mxu0 0
  %151 = vmatprep.subr.bf16.mxu0 0
  %152 = vmatpush1.bf16.msra.mxu0 0
  %153 = vmatprep.subr.bf16.mxu0 0
  %154 = vmatpush1.bf16.msra.mxu0 0
  %155 = vmatprep.subr.bf16.mxu0 0
  %156 = vmatpush1.bf16.msra.mxu0 0
  %157 = vmatprep.subr.bf16.mxu0 0
  %158 = vmatpush1.bf16.msra.mxu0 0
  %159 = vmatprep.mubr.bf16.mxu0 0
  %160 = vmatmul.mubr.bf16.gmra.mrb[0].mxu0 %v100
  %v161 = vpop.f32.mrb[0].mxu0
  %v162 = vadd.f32 %v41, %v161
  %v163 = vpop.f32.mrb[0].mxu0
  %v164 = vpop.f32.mrb[0].mxu0
  %v165 = vadd.f32 %v41, %v164
  %v166 = vpop.f32.mrb[0].mxu0
  %167 = vmatprep.mubr.bf16.mxu0 0
  %168 = vmatmul.mubr.bf16.gmra.mrb[0].mxu0 %v103
  %v169 = vpop.f32.mrb[0].mxu0
  %v170 = vadd.f32 %v41, %v169
  %v171 = vpop.f32.mrb[0].mxu0
  %v172 = vpop.f32.mrb[0].mxu0
  %v173 = vadd.f32 %v41, %v172
  %v174 = vpop.f32.mrb[0].mxu0
  %175 = vmatprep.mubr.bf16.mxu0 0
  %176 = vmatmul.mubr.bf16.gmra.mrb[0].mxu0 %v106
  %v177 = vpop.f32.mrb[0].mxu0
  %v178 = vadd.f32 %v41, %v177
  %v179 = vpop.f32.mrb[0].mxu0
  %v180 = vpop.f32.mrb[0].mxu0
  %v181 = vadd.f32 %v41, %v180
  %v182 = vpop.f32.mrb[0].mxu0
  %183 = vmatprep.mubr.bf16.mxu0 0
  %184 = vmatmul.mubr.bf16.gmra.mrb[0].mxu0 %v109
  %v185 = vpop.f32.mrb[0].mxu0
  %v186 = vadd.f32 %v41, %v185
  %v187 = vpop.f32.mrb[0].mxu0
  %v188 = vpop.f32.mrb[0].mxu0
  %v189 = vadd.f32 %v41, %v188
  %v190 = vpop.f32.mrb[0].mxu0
  %191 = vmatprep.mubr.bf16.mxu0 0
  %192 = vmatmul.mubr.bf16.gmra.mrb[0].mxu0 %v112
  %v193 = vpop.f32.mrb[0].mxu0
  %v194 = vadd.f32 %v41, %v193
  %v195 = vpop.f32.mrb[0].mxu0
  %v196 = vpop.f32.mrb[0].mxu0
  %v197 = vadd.f32 %v41, %v196
  %v198 = vpop.f32.mrb[0].mxu0
  %199 = vmatprep.mubr.bf16.mxu0 0
  %200 = vmatmul.mubr.bf16.gmra.mrb[0].mxu0 %v115
  %v201 = vpop.f32.mrb[0].mxu0
  %v202 = vadd.f32 %v41, %v201
  %v203 = vpop.f32.mrb[0].mxu0
  %v204 = vpop.f32.mrb[0].mxu0
  %v205 = vadd.f32 %v41, %v204
  %v206 = vpop.f32.mrb[0].mxu0
  %207 = vmatprep.mubr.bf16.mxu0 0
  %208 = vmatmul.mubr.bf16.gmra.mrb[0].mxu0 %v118
  %v209 = vpop.f32.mrb[0].mxu0
  %v210 = vadd.f32 %v41, %v209
  %v211 = vpop.f32.mrb[0].mxu0
  %v212 = vpop.f32.mrb[0].mxu0
  %v213 = vadd.f32 %v41, %v212
  %v214 = vpop.f32.mrb[0].mxu0
  %215 = vmatprep.mubr.bf16.mxu0 0
  %216 = vmatmul.mubr.bf16.gmra.mrb[0].mxu0 %v121
  %v217 = vpop.f32.mrb[0].mxu0
  %v218 = vadd.f32 %v41, %v217
  %v219 = vpop.f32.mrb[0].mxu0
  %v220 = vpop.f32.mrb[0].mxu0
  %v221 = vadd.f32 %v41, %v220
  %v222 = vpop.f32.mrb[0].mxu0
  %223 = vdwg.mxu0
  %v224 = vmax.f32 %v162, 0.0
  %v225 = vmax.f32 %v165, 0.0
  %v226 = vmax.f32 %v170, 0.0
  %v227 = vmax.f32 %v173, 0.0
  %v228 = vmax.f32 %v178, 0.0
  %v229 = vmax.f32 %v181, 0.0
  %v230 = vmax.f32 %v186, 0.0
  %v231 = vmax.f32 %v189, 0.0
  %v232 = vmax.f32 %v194, 0.0
  %v233 = vmax.f32 %v197, 0.0
  %v234 = vmax.f32 %v202, 0.0
  %v235 = vmax.f32 %v205, 0.0
  %v236 = vmax.f32 %v210, 0.0
  %v237 = vmax.f32 %v213, 0.0
  %v238 = vmax.f32 %v218, 0.0
  %v239 = vmax.f32 %v221, 0.0
  %v240 = vpack.c.bf16 %v225, %v224
  %v241 = vpack.c.bf16 %v227, %v226
  %v242 = vpack.c.bf16 %v229, %v228
  %v243 = vpack.c.bf16 %v231, %v230
  %v244 = vpack.c.bf16 %v233, %v232
  %v245 = vpack.c.bf16 %v235, %v234
  %v246 = vpack.c.bf16 %v237, %v236
  %v247 = vpack.c.bf16 %v239, %v238
  %v256 = vunpack.c.l.b16 %v240
  %v257 = vunpack.c.h.b16 %v240
  %v258 = vunpack.c.l.b16 %v241
  %v259 = vunpack.c.h.b16 %v241
  %v260 = vunpack.c.l.b16 %v242
  %v261 = vunpack.c.h.b16 %v242
  %v262 = vunpack.c.l.b16 %v243
  %v263 = vunpack.c.h.b16 %v243
  %v264 = vunpack.c.l.b16 %v244
  %v265 = vunpack.c.h.b16 %v244
  %v266 = vunpack.c.l.b16 %v245
  %v267 = vunpack.c.h.b16 %v245
  %v268 = vunpack.c.l.b16 %v246
  %v269 = vunpack.c.h.b16 %v246
  %v270 = vunpack.c.l.b16 %v247
  %v271 = vunpack.c.h.b16 %v247
  %v272 = vpack.c.b16 %v256, %v256
  %v273 = vpack.c.b16 %v257, %v257
  %v274 = vpack.c.b16 %v258, %v258
  %v275 = vpack.c.b16 %v259, %v259
  %v276 = vpack.c.b16 %v260, %v260
  %v277 = vpack.c.b16 %v261, %v261
  %v278 = vpack.c.b16 %v262, %v262
  %v279 = vpack.c.b16 %v263, %v263
  %v280 = vpack.c.b16 %v264, %v264
  %v281 = vpack.c.b16 %v265, %v265
  %v282 = vpack.c.b16 %v266, %v266
  %v283 = vpack.c.b16 %v267, %v267
  %v284 = vpack.c.b16 %v268, %v268
  %v285 = vpack.c.b16 %v269, %v269
  %v286 = vpack.c.b16 %v270, %v270
  %v287 = vpack.c.b16 %v271, %v271
  %304 = vst [vmem:[%s3] sm:$0xf] %v272
  %305 = vst [vmem:[%s3 + $0x4] sm:$0xf] %v273
  %306 = vst [vmem:[%s3 + $0x8] sm:$0xf] %v274
  %307 = vst [vmem:[%s3 + $0xc] sm:$0xf] %v275
  %308 = vst [vmem:[%s3 + $0x10] sm:$0xf] %v276
  %309 = vst [vmem:[%s3 + $0x14] sm:$0xf] %v277
  %310 = vst [vmem:[%s3 + $0x18] sm:$0xf] %v278
  %311 = vst [vmem:[%s3 + $0x1c] sm:$0xf] %v279
  %312 = vst [vmem:[%s3 + $0x20] sm:$0xf] %v280
  %313 = vst [vmem:[%s3 + $0x24] sm:$0xf] %v281
  %314 = vst [vmem:[%s3 + $0x28] sm:$0xf] %v282
  %315 = vst [vmem:[%s3 + $0x2c] sm:$0xf] %v283
  %316 = vst [vmem:[%s3 + $0x30] sm:$0xf] %v284
  %317 = vst [vmem:[%s3 + $0x34] sm:$0xf] %v285
  %318 = vst [vmem:[%s3 + $0x38] sm:$0xf] %v286
  %319 = vst [vmem:[%s3 + $0x3c] sm:$0xf] %v287
  // Predicated region
  $region14: #{_lambda_.4} parent=0 // pred_check
    _
  $region15: #{_lambda_.4} parent=0 // pred_check_branch
    %321 = sbr.rel (0) target = $region17
  $region16: #{_lambda_.4} parent=0 // pred_region
    _
  $region17: #{_lambda_.4} parent=0 // pred_fallthru
    _
  // Predicated region
  $region18: #{_lambda_.4} parent=0 // pred_check
    _
  $region19: #{_lambda_.4} parent=0 // pred_check_branch
    %323 = sbr.rel (0) target = $region21
  $region20: #{_lambda_.4} parent=0 // pred_region
    _
  $region21: #{_lambda_.4} parent=0 // pred_fallthru
    _

// kernel: _lambda_.5
$region0: #{_lambda_.5}
  #allocation0 [shape = 'u32[]', space=smem, size = 0x4, offset = 0x4, fixed_abs, tag = 'smem constant byte address 0x4 - core index']
  #allocation1 [shape = 'u32[144,128]{1,0:T(1,128)}', space=vmem, size = 0x12000, scoped, tag = 'internal scratch']
  %s0 = inlined_call_operand.vmem [shape: bf16[128,4], index: 0, kind: input, shape index: {}]
  %s1 = inlined_call_operand.vmem [shape: bf16[4,128], index: 1, kind: input, shape index: {}]
  %s2 = inlined_call_operand.vmem [shape: f32[1,128], index: 2, kind: input, shape index: {}]
  %s3 = inlined_call_operand.vmem [shape: f32[128,128], index: 3, kind: output, shape index: {}]
  %s4 = sld [smem:[#allocation0]]
  $region22: #{_lambda_.5} parent=0
    _
  %s6 = ssub.s32 1, %s4
  %s7 = scalar_select 0, %s6, %s4
  // Predicated region
  $region2: #{_lambda_.5} parent=0 // pred_check
    _
  $region3: #{_lambda_.5} parent=0 // pred_check_branch
    %9 = sbr.rel (0) target = $region5
  $region4: #{_lambda_.5} parent=0 // pred_region
    _
  $region5: #{_lambda_.5} parent=0 // pred_fallthru
    _
  // Predicated region
  $region6: #{_lambda_.5} parent=0 // pred_check
    _
  $region7: #{_lambda_.5} parent=0 // pred_check_branch
    %11 = sbr.rel (0) target = $region9
  $region8: #{_lambda_.5} parent=0 // pred_region
    _
  $region9: #{_lambda_.5} parent=0 // pred_fallthru
    _
  // Predicated region
  $region10: #{_lambda_.5} parent=0 // pred_check
    _
  $region11: #{_lambda_.5} parent=0 // pred_check_branch
    %13 = sbr.rel (0) target = $region13
  $region12: #{_lambda_.5} parent=0 // pred_region
    _
  $region13: #{_lambda_.5} parent=0 // pred_fallthru
    _
  %v15 = vld [vmem:[%s0] sm:$0xf]
  %v16 = vld [vmem:[%s0 + $0x4] sm:$0xf]
  %v17 = vld [vmem:[%s0 + $0x8] sm:$0xf]
  %v18 = vld [vmem:[%s0 + $0xc] sm:$0xf]
  %v19 = vld [vmem:[%s0 + $0x10] sm:$0xf]
  %v20 = vld [vmem:[%s0 + $0x14] sm:$0xf]
  %v21 = vld [vmem:[%s0 + $0x18] sm:$0xf]
  %v22 = vld [vmem:[%s0 + $0x1c] sm:$0xf]
  %v23 = vld [vmem:[%s0 + $0x20] sm:$0xf]
  %v24 = vld [vmem:[%s0 + $0x24] sm:$0xf]
  %v25 = vld [vmem:[%s0 + $0x28] sm:$0xf]
  %v26 = vld [vmem:[%s0 + $0x2c] sm:$0xf]
  %v27 = vld [vmem:[%s0 + $0x30] sm:$0xf]
  %v28 = vld [vmem:[%s0 + $0x34] sm:$0xf]
  %v29 = vld [vmem:[%s0 + $0x38] sm:$0xf]
  %v30 = vld [vmem:[%s0 + $0x3c] sm:$0xf]
  %v31 = vld [vmem:[%s1] sm:$0x3]
  %v32 = vld [vmem:[%s2] sm:$0x1]
  %v34 = vlaneseq
  %v35 = vshrl.u32 %v34, 7
  %v36 = vsub.s32 0, %v35
  %v37 = vrot.slane %v32, %v36
  %v55 = vunpack.c.l.b16 %v15
  %v56 = vunpack.c.l.b16 %v16
  %v57 = vunpack.c.l.b16 %v17
  %v58 = vunpack.c.l.b16 %v18
  %v59 = vunpack.c.l.b16 %v19
  %v60 = vunpack.c.l.b16 %v20
  %v61 = vunpack.c.l.b16 %v21
  %v62 = vunpack.c.l.b16 %v22
  %v63 = vunpack.c.l.b16 %v23
  %v64 = vunpack.c.l.b16 %v24
  %v65 = vunpack.c.l.b16 %v25
  %v66 = vunpack.c.l.b16 %v26
  %v67 = vunpack.c.l.b16 %v27
  %v68 = vunpack.c.l.b16 %v28
  %v69 = vunpack.c.l.b16 %v29
  %v70 = vunpack.c.l.b16 %v30
  %v71 = vpack.c.b16 %v56, %v55
  %v72 = vpack.c.b16 %v58, %v57
  %v73 = vpack.c.b16 %v60, %v59
  %v74 = vpack.c.b16 %v62, %v61
  %v75 = vpack.c.b16 %v64, %v63
  %v76 = vpack.c.b16 %v66, %v65
  %v77 = vpack.c.b16 %v68, %v67
  %v78 = vpack.c.b16 %v70, %v69
  %vm79 = vcmask 31744
  %v81 = vsel %vm79, %v71, 0
  %v84 = vsel %vm79, %v72, 0
  %v87 = vsel %vm79, %v73, 0
  %v90 = vsel %vm79, %v74, 0
  %v93 = vsel %vm79, %v75, 0
  %v96 = vsel %vm79, %v76, 0
  %v99 = vsel %vm79, %v77, 0
  %v102 = vsel %vm79, %v78, 0
  %vm104 = vcmask 1041408
  %v106 = vsel %vm104, %v31, 0
  %108 = vmatprep.subr.bf16.mxu0 0
  %109 = vmatpush1.bf16.msra.mxu0 %v106
  %110 = vmatprep.subr.bf16.mxu0 0
  %111 = vmatpush1.bf16.msra.mxu0 0
  %112 = vmatprep.subr.bf16.mxu0 0
  %113 = vmatpush1.bf16.msra.mxu0 0
  %114 = vmatprep.subr.bf16.mxu0 0
  %115 = vmatpush1.bf16.msra.mxu0 0
  %116 = vmatprep.subr.bf16.mxu0 0
  %117 = vmatpush1.bf16.msra.mxu0 0
  %118 = vmatprep.subr.bf16.mxu0 0
  %119 = vmatpush1.bf16.msra.mxu0 0
  %120 = vmatprep.subr.bf16.mxu0 0
  %121 = vmatpush1.bf16.msra.mxu0 0
  %122 = vmatprep.subr.bf16.mxu0 0
  %123 = vmatpush1.bf16.msra.mxu0 0
  %124 = vmatprep.subr.bf16.mxu0 0
  %125 = vmatpush1.bf16.msra.mxu0 0
  %126 = vmatprep.subr.bf16.mxu0 0
  %127 = vmatpush1.bf16.msra.mxu0 0
  %128 = vmatprep.subr.bf16.mxu0 0
  %129 = vmatpush1.bf16.msra.mxu0 0
  %130 = vmatprep.subr.bf16.mxu0 0
  %131 = vmatpush1.bf16.msra.mxu0 0
  %132 = vmatprep.subr.bf16.mxu0 0
  %133 = vmatpush1.bf16.msra.mxu0 0
  %134 = vmatprep.subr.bf16.mxu0 0
  %135 = vmatpush1.bf16.msra.mxu0 0
  %136 = vmatprep.subr.bf16.mxu0 0
  %137 = vmatpush1.bf16.msra.mxu0 0
  %138 = vmatprep.subr.bf16.mxu0 0
  %139 = vmatpush1.bf16.msra.mxu0 0
  %140 = vmatprep.mubr.bf16.mxu0 0
  %141 = vmatmul.mubr.bf16.gmra.mrb[0].mxu0 %v81
  %v142 = vpop.f32.mrb[0].mxu0
  %v143 = vadd.f32 %v37, %v142
  %v144 = vpop.f32.mrb[0].mxu0
  %v145 = vpop.f32.mrb[0].mxu0
  %v146 = vadd.f32 %v37, %v145
  %v147 = vpop.f32.mrb[0].mxu0
  %148 = vmatprep.mubr.bf16.mxu0 0
  %149 = vmatmul.mubr.bf16.gmra.mrb[0].mxu0 %v84
  %v150 = vpop.f32.mrb[0].mxu0
  %v151 = vadd.f32 %v37, %v150
  %v152 = vpop.f32.mrb[0].mxu0
  %v153 = vpop.f32.mrb[0].mxu0
  %v154 = vadd.f32 %v37, %v153
  %v155 = vpop.f32.mrb[0].mxu0
  %156 = vmatprep.mubr.bf16.mxu0 0
  %157 = vmatmul.mubr.bf16.gmra.mrb[0].mxu0 %v87
  %v158 = vpop.f32.mrb[0].mxu0
  %v159 = vadd.f32 %v37, %v158
  %v160 = vpop.f32.mrb[0].mxu0
  %v161 = vpop.f32.mrb[0].mxu0
  %v162 = vadd.f32 %v37, %v161
  %v163 = vpop.f32.mrb[0].mxu0
  %164 = vmatprep.mubr.bf16.mxu0 0
  %165 = vmatmul.mubr.bf16.gmra.mrb[0].mxu0 %v90
  %v166 = vpop.f32.mrb[0].mxu0
  %v167 = vadd.f32 %v37, %v166
  %v168 = vpop.f32.mrb[0].mxu0
  %v169 = vpop.f32.mrb[0].mxu0
  %v170 = vadd.f32 %v37, %v169
  %v171 = vpop.f32.mrb[0].mxu0
  %172 = vmatprep.mubr.bf16.mxu0 0
  %173 = vmatmul.mubr.bf16.gmra.mrb[0].mxu0 %v93
  %v174 = vpop.f32.mrb[0].mxu0
  %v175 = vadd.f32 %v37, %v174
  %v176 = vpop.f32.mrb[0].mxu0
  %v177 = vpop.f32.mrb[0].mxu0
  %v178 = vadd.f32 %v37, %v177
  %v179 = vpop.f32.mrb[0].mxu0
  %180 = vmatprep.mubr.bf16.mxu0 0
  %181 = vmatmul.mubr.bf16.gmra.mrb[0].mxu0 %v96
  %v182 = vpop.f32.mrb[0].mxu0
  %v183 = vadd.f32 %v37, %v182
  %v184 = vpop.f32.mrb[0].mxu0
  %v185 = vpop.f32.mrb[0].mxu0
  %v186 = vadd.f32 %v37, %v185
  %v187 = vpop.f32.mrb[0].mxu0
  %188 = vmatprep.mubr.bf16.mxu0 0
  %189 = vmatmul.mubr.bf16.gmra.mrb[0].mxu0 %v99
  %v190 = vpop.f32.mrb[0].mxu0
  %v191 = vadd.f32 %v37, %v190
  %v192 = vpop.f32.mrb[0].mxu0
  %v193 = vpop.f32.mrb[0].mxu0
  %v194 = vadd.f32 %v37, %v193
  %v195 = vpop.f32.mrb[0].mxu0
  %196 = vmatprep.mubr.bf16.mxu0 0
  %197 = vmatmul.mubr.bf16.gmra.mrb[0].mxu0 %v102
  %v198 = vpop.f32.mrb[0].mxu0
  %v199 = vadd.f32 %v37, %v198
  %v200 = vpop.f32.mrb[0].mxu0
  %v201 = vpop.f32.mrb[0].mxu0
  %v202 = vadd.f32 %v37, %v201
  %v203 = vpop.f32.mrb[0].mxu0
  %204 = vdwg.mxu0
  %205 = vst [vmem:[%s3] sm:$0xff] %v143
  %206 = vst [vmem:[%s3 + $0x8] sm:$0xff] %v146
  %207 = vst [vmem:[%s3 + $0x10] sm:$0xff] %v151
  %208 = vst [vmem:[%s3 + $0x18] sm:$0xff] %v154
  %209 = vst [vmem:[%s3 + $0x20] sm:$0xff] %v159
  %210 = vst [vmem:[%s3 + $0x28] sm:$0xff] %v162
  %211 = vst [vmem:[%s3 + $0x30] sm:$0xff] %v167
  %212 = vst [vmem:[%s3 + $0x38] sm:$0xff] %v170
  %213 = vst [vmem:[%s3 + $0x40] sm:$0xff] %v175
  %214 = vst [vmem:[%s3 + $0x48] sm:$0xff] %v178
  %215 = vst [vmem:[%s3 + $0x50] sm:$0xff] %v183
  %216 = vst [vmem:[%s3 + $0x58] sm:$0xff] %v186
  %217 = vst [vmem:[%s3 + $0x60] sm:$0xff] %v191
  %218 = vst [vmem:[%s3 + $0x68] sm:$0xff] %v194
  %219 = vst [vmem:[%s3 + $0x70] sm:$0xff] %v199
  %220 = vst [vmem:[%s3 + $0x78] sm:$0xff] %v202
  // Predicated region
  $region14: #{_lambda_.5} parent=0 // pred_check
    _
  $region15: #{_lambda_.5} parent=0 // pred_check_branch
    %222 = sbr.rel (0) target = $region17
  $region16: #{_lambda_.5} parent=0 // pred_region
    _
  $region17: #{_lambda_.5} parent=0 // pred_fallthru
    _
  // Predicated region
  $region18: #{_lambda_.5} parent=0 // pred_check
    _
  $region19: #{_lambda_.5} parent=0 // pred_check_branch
    %224 = sbr.rel (0) target = $region21
  $region20: #{_lambda_.5} parent=0 // pred_region
    _
  $region21: #{_lambda_.5} parent=0 // pred_fallthru
    _

// kernel: _lambda_.7
$region0: #{_lambda_.7}
  #allocation0 [shape = 'u32[]', space=smem, size = 0x4, offset = 0x4, fixed_abs, tag = 'smem constant byte address 0x4 - core index']
  #allocation1 [shape = 'u32[144,128]{1,0:T(1,128)}', space=vmem, size = 0x12000, scoped, tag = 'internal scratch']
  %s0 = inlined_call_operand.vmem [shape: f32[16,128], index: 0, kind: input, shape index: {}]
  %s1 = inlined_call_operand.vmem [shape: f32[16,128], index: 1, kind: output, shape index: {}]
  %s2 = sld [smem:[#allocation0]]
  $region14: #{_lambda_.7} parent=0
    _
  %s4 = ssub.s32 1, %s2
  %s5 = scalar_select 0, %s4, %s2
  // Predicated region
  $region2: #{_lambda_.7} parent=0 // pred_check
    _
  $region3: #{_lambda_.7} parent=0 // pred_check_branch
    %7 = sbr.rel (0) target = $region5
  $region4: #{_lambda_.7} parent=0 // pred_region
    _
  $region5: #{_lambda_.7} parent=0 // pred_fallthru
    _
  %v8 = vld [vmem:[%s0] sm:$0xff]
  %v9 = vld [vmem:[%s0 + $0x8] sm:$0xff]
  %v10 = vmax.f32 %v8, 0.0
  %v11 = vmax.f32 %v9, 0.0
  %12 = vst [vmem:[%s1] sm:$0xff] %v10
  %13 = vst [vmem:[%s1 + $0x8] sm:$0xff] %v11
  // Predicated region
  $region6: #{_lambda_.7} parent=0 // pred_check
    _
  $region7: #{_lambda_.7} parent=0 // pred_check_branch
    %15 = sbr.rel (0) target = $region9
  $region8: #{_lambda_.7} parent=0 // pred_region
    _
  $region9: #{_lambda_.7} parent=0 // pred_fallthru
    _
  // Predicated region
  $region10: #{_lambda_.7} parent=0 // pred_check
    _
  $region11: #{_lambda_.7} parent=0 // pred_check_branch
    %17 = sbr.rel (0) target = $region13
  $region12: #{_lambda_.7} parent=0 // pred_region
    _
  $region13: #{_lambda_.7} parent=0 // pred_fallthru
    _

// kernel: _lambda_.6
$region0: #{_lambda_.6}
  #allocation0 [shape = 'u32[]', space=smem, size = 0x4, offset = 0x4, fixed_abs, tag = 'smem constant byte address 0x4 - core index']
  #allocation1 [shape = 'u32[144,128]{1,0:T(1,128)}', space=vmem, size = 0x12000, scoped, tag = 'internal scratch']
  %s0 = inlined_call_operand.vmem [shape: bf16[128,72], index: 0, kind: input, shape index: {}]
  %s1 = inlined_call_operand.vmem [shape: bf16[72,128], index: 1, kind: input, shape index: {}]
  %s2 = inlined_call_operand.vmem [shape: f32[1,128], index: 2, kind: input, shape index: {}]
  %s3 = inlined_call_operand.vmem [shape: f32[128,128], index: 3, kind: input, shape index: {}]
  %s4 = inlined_call_operand.vmem [shape: f32[128,128], index: 4, kind: output, shape index: {}]
  %s5 = sld [smem:[#allocation0]]
  $region26: #{_lambda_.6} parent=0
    _
  %s7 = ssub.s32 1, %s5
  %s8 = scalar_select 0, %s7, %s5
  // Predicated region
  $region2: #{_lambda_.6} parent=0 // pred_check
    _
  $region3: #{_lambda_.6} parent=0 // pred_check_branch
    %10 = sbr.rel (0) target = $region5
  $region4: #{_lambda_.6} parent=0 // pred_region
    _
  $region5: #{_lambda_.6} parent=0 // pred_fallthru
    _
  // Predicated region
  $region6: #{_lambda_.6} parent=0 // pred_check
    _
  $region7: #{_lambda_.6} parent=0 // pred_check_branch
    %12 = sbr.rel (0) target = $region9
  $region8: #{_lambda_.6} parent=0 // pred_region
    _
  $region9: #{_lambda_.6} parent=0 // pred_fallthru
    _
  // Predicated region
  $region10: #{_lambda_.6} parent=0 // pred_check
    _
  $region11: #{_lambda_.6} parent=0 // pred_check_branch
    %14 = sbr.rel (0) target = $region13
  $region12: #{_lambda_.6} parent=0 // pred_region
    _
  $region13: #{_lambda_.6} parent=0 // pred_fallthru
    _
  // Predicated region
  $region14: #{_lambda_.6} parent=0 // pred_check
    _
  $region15: #{_lambda_.6} parent=0 // pred_check_branch
    %16 = sbr.rel (0) target = $region17
  $region16: #{_lambda_.6} parent=0 // pred_region
    _
  $region17: #{_lambda_.6} parent=0 // pred_fallthru
    _
  %v18 = vld [vmem:[%s0] sm:$0xf]
  %v19 = vld [vmem:[%s0 + $0x4] sm:$0xf]
  %v20 = vld [vmem:[%s0 + $0x8] sm:$0xf]
  %v21 = vld [vmem:[%s0 + $0xc] sm:$0xf]
  %v22 = vld [vmem:[%s0 + $0x10] sm:$0xf]
  %v23 = vld [vmem:[%s0 + $0x14] sm:$0xf]
  %v24 = vld [vmem:[%s0 + $0x18] sm:$0xf]
  %v25 = vld [vmem:[%s0 + $0x1c] sm:$0xf]
  %v26 = vld [vmem:[%s0 + $0x20] sm:$0xf]
  %v27 = vld [vmem:[%s0 + $0x24] sm:$0xf]
  %v28 = vld [vmem:[%s0 + $0x28] sm:$0xf]
  %v29 = vld [vmem:[%s0 + $0x2c] sm:$0xf]
  %v30 = vld [vmem:[%s0 + $0x30] sm:$0xf]
  %v31 = vld [vmem:[%s0 + $0x34] sm:$0xf]
  %v32 = vld [vmem:[%s0 + $0x38] sm:$0xf]
  %v33 = vld [vmem:[%s0 + $0x3c] sm:$0xf]
  %v34 = vld [vmem:[%s1] sm:$0xf]
  %v35 = vld [vmem:[%s1 + $0x4] sm:$0xf]
  %v36 = vld [vmem:[%s1 + $0x8] sm:$0xf]
  %v37 = vld [vmem:[%s1 + $0xc] sm:$0xf]
  %v38 = vld [vmem:[%s1 + $0x10] sm:$0xf]
  %v39 = vld [vmem:[%s1 + $0x14] sm:$0xf]
  %v40 = vld [vmem:[%s1 + $0x18] sm:$0xf]
  %v41 = vld [vmem:[%s1 + $0x1c] sm:$0xf]
  %v42 = vld [vmem:[%s1 + $0x20] sm:$0xf]
  %v43 = vld [vmem:[%s2] sm:$0x1]
  %v45 = vlaneseq
  %v46 = vshrl.u32 %v45, 7
  %v47 = vsub.s32 0, %v46
  %v48 = vrot.slane %v43, %v47
  %v66 = vunpack.c.l.b16 %v18
  %v67 = vunpack.c.l.b16 %v19
  %v68 = vunpack.c.l.b16 %v20
  %v69 = vunpack.c.l.b16 %v21
  %v70 = vunpack.c.l.b16 %v22
  %v71 = vunpack.c.l.b16 %v23
  %v72 = vunpack.c.l.b16 %v24
  %v73 = vunpack.c.l.b16 %v25
  %v74 = vunpack.c.l.b16 %v26
  %v75 = vunpack.c.l.b16 %v27
  %v76 = vunpack.c.l.b16 %v28
  %v77 = vunpack.c.l.b16 %v29
  %v78 = vunpack.c.l.b16 %v30
  %v79 = vunpack.c.l.b16 %v31
  %v80 = vunpack.c.l.b16 %v32
  %v81 = vunpack.c.l.b16 %v33
  %v82 = vpack.c.b16 %v67, %v66
  %v83 = vpack.c.b16 %v69, %v68
  %v84 = vpack.c.b16 %v71, %v70
  %v85 = vpack.c.b16 %v73, %v72
  %v86 = vpack.c.b16 %v75, %v74
  %v87 = vpack.c.b16 %v77, %v76
  %v88 = vpack.c.b16 %v79, %v78
  %v89 = vpack.c.b16 %v81, %v80
  %v99 = vunpack.c.l.b16 %v34
  %v100 = vunpack.c.l.b16 %v35
  %v101 = vunpack.c.l.b16 %v36
  %v102 = vunpack.c.l.b16 %v37
  %v103 = vunpack.c.l.b16 %v38
  %v104 = vunpack.c.l.b16 %v39
  %v105 = vunpack.c.l.b16 %v40
  %v106 = vunpack.c.l.b16 %v41
  %v107 = vunpack.c.l.b16 %v42
  %v108 = vpack.c.b16 %v100, %v99
  %v109 = vpack.c.b16 %v102, %v101
  %v110 = vpack.c.b16 %v104, %v103
  %v111 = vpack.c.b16 %v106, %v105
  %v112 = vpack.c.b16 %v107, %v107
  %vm117 = vcmask 588800
  %v119 = vsel %vm117, %v82, 0
  %v122 = vsel %vm117, %v83, 0
  %v125 = vsel %vm117, %v84, 0
  %v128 = vsel %vm117, %v85, 0
  %v131 = vsel %vm117, %v86, 0
  %v134 = vsel %vm117, %v87, 0
  %v137 = vsel %vm117, %v88, 0
  %v140 = vsel %vm117, %v89, 0
  %vm142 = vcmask 1043456
  %v144 = vsel %vm142, %v112, 0
  %146 = vmatprep.subr.bf16.mxu0 0
  %147 = vmatpush1.bf16.msra.mxu0 %v108
  %148 = vmatprep.subr.bf16.mxu0 0
  %149 = vmatpush1.bf16.msra.mxu0 %v109
  %150 = vmatprep.subr.bf16.mxu0 0
  %151 = vmatpush1.bf16.msra.mxu0 %v110
  %152 = vmatprep.subr.bf16.mxu0 0
  %153 = vmatpush1.bf16.msra.mxu0 %v111
  %154 = vmatprep.subr.bf16.mxu0 0
  %155 = vmatpush1.bf16.msra.mxu0 %v144
  %156 = vmatprep.subr.bf16.mxu0 0
  %157 = vmatpush1.bf16.msra.mxu0 0
  %158 = vmatprep.subr.bf16.mxu0 0
  %159 = vmatpush1.bf16.msra.mxu0 0
  %160 = vmatprep.subr.bf16.mxu0 0
  %161 = vmatpush1.bf16.msra.mxu0 0
  %162 = vmatprep.subr.bf16.mxu0 0
  %163 = vmatpush1.bf16.msra.mxu0 0
  %164 = vmatprep.subr.bf16.mxu0 0
  %165 = vmatpush1.bf16.msra.mxu0 0
  %166 = vmatprep.subr.bf16.mxu0 0
  %167 = vmatpush1.bf16.msra.mxu0 0
  %168 = vmatprep.subr.bf16.mxu0 0
  %169 = vmatpush1.bf16.msra.mxu0 0
  %170 = vmatprep.subr.bf16.mxu0 0
  %171 = vmatpush1.bf16.msra.mxu0 0
  %172 = vmatprep.subr.bf16.mxu0 0
  %173 = vmatpush1.bf16.msra.mxu0 0
  %174 = vmatprep.subr.bf16.mxu0 0
  %175 = vmatpush1.bf16.msra.mxu0 0
  %176 = vmatprep.subr.bf16.mxu0 0
  %177 = vmatpush1.bf16.msra.mxu0 0
  %178 = vmatprep.mubr.bf16.mxu0 0
  %179 = vmatmul.mubr.bf16.gmra.mrb[0].mxu0 %v119
  %v180 = vpop.f32.mrb[0].mxu0
  %v181 = vadd.f32 %v48, %v180
  %v182 = vpop.f32.mrb[0].mxu0
  %v183 = vpop.f32.mrb[0].mxu0
  %v184 = vadd.f32 %v48, %v183
  %v185 = vpop.f32.mrb[0].mxu0
  %186 = vmatprep.mubr.bf16.mxu0 0
  %187 = vmatmul.mubr.bf16.gmra.mrb[0].mxu0 %v122
  %v188 = vpop.f32.mrb[0].mxu0
  %v189 = vadd.f32 %v48, %v188
  %v190 = vpop.f32.mrb[0].mxu0
  %v191 = vpop.f32.mrb[0].mxu0
  %v192 = vadd.f32 %v48, %v191
  %v193 = vpop.f32.mrb[0].mxu0
  %194 = vmatprep.mubr.bf16.mxu0 0
  %195 = vmatmul.mubr.bf16.gmra.mrb[0].mxu0 %v125
  %v196 = vpop.f32.mrb[0].mxu0
  %v197 = vadd.f32 %v48, %v196
  %v198 = vpop.f32.mrb[0].mxu0
  %v199 = vpop.f32.mrb[0].mxu0
  %v200 = vadd.f32 %v48, %v199
  %v201 = vpop.f32.mrb[0].mxu0
  %202 = vmatprep.mubr.bf16.mxu0 0
  %203 = vmatmul.mubr.bf16.gmra.mrb[0].mxu0 %v128
  %v204 = vpop.f32.mrb[0].mxu0
  %v205 = vadd.f32 %v48, %v204
  %v206 = vpop.f32.mrb[0].mxu0
  %v207 = vpop.f32.mrb[0].mxu0
  %v208 = vadd.f32 %v48, %v207
  %v209 = vpop.f32.mrb[0].mxu0
  %210 = vmatprep.mubr.bf16.mxu0 0
  %211 = vmatmul.mubr.bf16.gmra.mrb[0].mxu0 %v131
  %v212 = vpop.f32.mrb[0].mxu0
  %v213 = vadd.f32 %v48, %v212
  %v214 = vpop.f32.mrb[0].mxu0
  %v215 = vpop.f32.mrb[0].mxu0
  %v216 = vadd.f32 %v48, %v215
  %v217 = vpop.f32.mrb[0].mxu0
  %218 = vmatprep.mubr.bf16.mxu0 0
  %219 = vmatmul.mubr.bf16.gmra.mrb[0].mxu0 %v134
  %v220 = vpop.f32.mrb[0].mxu0
  %v221 = vadd.f32 %v48, %v220
  %v222 = vpop.f32.mrb[0].mxu0
  %v223 = vpop.f32.mrb[0].mxu0
  %v224 = vadd.f32 %v48, %v223
  %v225 = vpop.f32.mrb[0].mxu0
  %226 = vmatprep.mubr.bf16.mxu0 0
  %227 = vmatmul.mubr.bf16.gmra.mrb[0].mxu0 %v137
  %v228 = vpop.f32.mrb[0].mxu0
  %v229 = vadd.f32 %v48, %v228
  %v230 = vpop.f32.mrb[0].mxu0
  %v231 = vpop.f32.mrb[0].mxu0
  %v232 = vadd.f32 %v48, %v231
  %v233 = vpop.f32.mrb[0].mxu0
  %234 = vmatprep.mubr.bf16.mxu0 0
  %235 = vmatmul.mubr.bf16.gmra.mrb[0].mxu0 %v140
  %v236 = vpop.f32.mrb[0].mxu0
  %v237 = vadd.f32 %v48, %v236
  %v238 = vpop.f32.mrb[0].mxu0
  %v239 = vpop.f32.mrb[0].mxu0
  %v240 = vadd.f32 %v48, %v239
  %v241 = vpop.f32.mrb[0].mxu0
  %242 = vdwg.mxu0
  %v243 = vld [vmem:[%s3] sm:$0xff]
  %v244 = vld [vmem:[%s3 + $0x8] sm:$0xff]
  %v245 = vld [vmem:[%s3 + $0x10] sm:$0xff]
  %v246 = vld [vmem:[%s3 + $0x18] sm:$0xff]
  %v247 = vld [vmem:[%s3 + $0x20] sm:$0xff]
  %v248 = vld [vmem:[%s3 + $0x28] sm:$0xff]
  %v249 = vld [vmem:[%s3 + $0x30] sm:$0xff]
  %v250 = vld [vmem:[%s3 + $0x38] sm:$0xff]
  %v251 = vld [vmem:[%s3 + $0x40] sm:$0xff]
  %v252 = vld [vmem:[%s3 + $0x48] sm:$0xff]
  %v253 = vld [vmem:[%s3 + $0x50] sm:$0xff]
  %v254 = vld [vmem:[%s3 + $0x58] sm:$0xff]
  %v255 = vld [vmem:[%s3 + $0x60] sm:$0xff]
  %v256 = vld [vmem:[%s3 + $0x68] sm:$0xff]
  %v257 = vld [vmem:[%s3 + $0x70] sm:$0xff]
  %v258 = vld [vmem:[%s3 + $0x78] sm:$0xff]
  %v259 = vadd.f32 %v181, %v243
  %v260 = vadd.f32 %v184, %v244
  %v261 = vadd.f32 %v189, %v245
  %v262 = vadd.f32 %v192, %v246
  %v263 = vadd.f32 %v197, %v247
  %v264 = vadd.f32 %v200, %v248
  %v265 = vadd.f32 %v205, %v249
  %v266 = vadd.f32 %v208, %v250
  %v267 = vadd.f32 %v213, %v251
  %v268 = vadd.f32 %v216, %v252
  %v269 = vadd.f32 %v221, %v253
  %v270 = vadd.f32 %v224, %v254
  %v271 = vadd.f32 %v229, %v255
  %v272 = vadd.f32 %v232, %v256
  %v273 = vadd.f32 %v237, %v257
  %v274 = vadd.f32 %v240, %v258
  %275 = vst [vmem:[%s4] sm:$0xff] %v259
  %276 = vst [vmem:[%s4 + $0x8] sm:$0xff] %v260
  %277 = vst [vmem:[%s4 + $0x10] sm:$0xff] %v261
  %278 = vst [vmem:[%s4 + $0x18] sm:$0xff] %v262
  %279 = vst [vmem:[%s4 + $0x20] sm:$0xff] %v263
  %280 = vst [vmem:[%s4 + $0x28] sm:$0xff] %v264
  %281 = vst [vmem:[%s4 + $0x30] sm:$0xff] %v265
  %282 = vst [vmem:[%s4 + $0x38] sm:$0xff] %v266
  %283 = vst [vmem:[%s4 + $0x40] sm:$0xff] %v267
  %284 = vst [vmem:[%s4 + $0x48] sm:$0xff] %v268
  %285 = vst [vmem:[%s4 + $0x50] sm:$0xff] %v269
  %286 = vst [vmem:[%s4 + $0x58] sm:$0xff] %v270
  %287 = vst [vmem:[%s4 + $0x60] sm:$0xff] %v271
  %288 = vst [vmem:[%s4 + $0x68] sm:$0xff] %v272
  %289 = vst [vmem:[%s4 + $0x70] sm:$0xff] %v273
  %290 = vst [vmem:[%s4 + $0x78] sm:$0xff] %v274
  // Predicated region
  $region18: #{_lambda_.6} parent=0 // pred_check
    _
  $region19: #{_lambda_.6} parent=0 // pred_check_branch
    %292 = sbr.rel (0) target = $region21
  $region20: #{_lambda_.6} parent=0 // pred_region
    _
  $region21: #{_lambda_.6} parent=0 // pred_fallthru
    _
  // Predicated region
  $region22: #{_lambda_.6} parent=0 // pred_check
    _
  $region23: #{_lambda_.6} parent=0 // pred_check_branch
    %294 = sbr.rel (0) target = $region25
  $region24: #{_lambda_.6} parent=0 // pred_region
    _
  $region25: #{_lambda_.6} parent=0 // pred_fallthru
    _

</llo_original>
